<compile_context>
chip_gen: v5e
topology: v5e:2x2
jax: 0.10.0
libtpu: 0.0.40
codegen_flags: <defaults>
</compile_context>

<pallas_src>
import functools

import jax
import jax.numpy as jnp
from jax.experimental import pallas as pl
from jax.experimental.pallas import tpu as pltpu


_TARGET_BLOCK_BYTES = 8 * 1024 * 1024   # per input buffer (x2 double-buffered)
_VMEM_LIMIT_CAP = 48 * 1024 * 1024      # stays below v7x's 64 MiB physical VMEM


def _num_tensorcores() -> int:
    """2 on v7x (2 TC/chip); 1 on v5e/v6e where a split is just a serial loop."""
    try:
        kind = jax.devices()[0].device_kind.lower()
    except Exception:  # no devices / unusual backend -> safe default
        return 1
    return 2 if ("v7" in kind or "tpu7" in kind) else 1


def _hinge_loss_kernel(x_ref, out_ref, *, tiles_total, rows_in_last_tile):
    """Processes one (tile_rows, 128) tile of the interleaved score stream.

    Sums hinge values over the sublane axis for ALL 128 lanes into the
    resident (1, 1, 128) f32 output block; the wrapper keeps the even lanes.
    """
    c = pl.program_id(0)                   # split (TensorCore) index
    i = pl.program_id(1)                   # reduction step within this split
    t = c * pl.num_programs(1) + i         # logical tile index
    tile_rows = x_ref.shape[0]
    last_real = tiles_total - 1

    @pl.when(i == 0)
    def _init():
        out_ref[...] = jnp.zeros_like(out_ref)

    def partial_sum(mask_ragged_rows):
        x = x_ref[...]
        # roll by +127 == roll by -1 along lanes (axis must be non-negative):
        # even lane j then sees x[j] - x[j+1] = scores[:, 0] - scores[:, 1].
        # Keep roll/sub in the native dtype (bf16 stays packed on v6e/v7x) and
        # upcast only the difference for the hinge + f32 accumulation.
        diff = (x - pltpu.roll(x, shift=127, axis=1)).astype(jnp.float32)
        hinge = jnp.maximum(1.0 - diff, 0.0)
        if mask_ragged_rows:
            # Only the final ragged tile pays for a sublane-index mask
            # (jnp.where, not multiply, so partial-block garbage/NaN is safe).
            row = jax.lax.broadcasted_iota(jnp.int32, hinge.shape, 0)
            hinge = jnp.where(row < rows_in_last_tile, hinge, 0.0)
        return jnp.sum(hinge, axis=0, keepdims=True)[None]     # (1, 1, 128)

    if rows_in_last_tile == tile_rows:
        # Every real tile is fully valid: single branch-free accumulate path,
        # gated only against overflow (clamped-duplicate) grid steps.
        @pl.when(t <= last_real)
        def _acc():
            out_ref[...] += partial_sum(False)
    else:
        # Interior tiles: branch-free.
        @pl.when(t < last_real)
        def _acc_interior():
            out_ref[...] += partial_sum(False)

        # Final real tile: mask the partial-block row tail.
        @pl.when(t == last_real)
        def _acc_last():
            out_ref[...] += partial_sum(True)


def hinge_loss(scores, labels=None):
    """Pallas equivalent of HingeLoss.forward(scores, labels)."""
    del labels  # unused, matching the PyTorch module
    if scores.ndim != 2 or scores.shape[1] < 2:
        raise ValueError(f"scores must be (N, >=2), got {scores.shape}")
    n = scores.shape[0]

    pairs = scores[:, :2]          # free view when scores already has 2 cols
    if not jnp.issubdtype(pairs.dtype, jnp.floating):
        pairs = pairs.astype(jnp.float32)
    flat = pairs.reshape(-1)       # interleaved [s00, s01, s10, s11, ...]

    n_valid = 2 * n
    rows_full = n_valid // 128
    rem = n_valid - rows_full * 128          # < 128, always even

    total = jnp.zeros((), jnp.float32)

    if rows_full > 0:
        main = flat if rem == 0 else flat[: rows_full * 128]
        x = main.reshape(rows_full, 128)
        itemsize = jnp.dtype(x.dtype).itemsize

        max_tile_rows = max(8, _TARGET_BLOCK_BYTES // (128 * itemsize))
        tile_rows = min(rows_full, max_tile_rows)
        tiles_total = pl.cdiv(rows_full, tile_rows)
        num_splits = min(_num_tensorcores(), tiles_total)
        tiles_per_split = pl.cdiv(tiles_total, num_splits)
        last_real = tiles_total - 1
        rows_in_last_tile = rows_full - last_real * tile_rows

        block_bytes = tile_rows * 128 * itemsize
        vmem_limit = min(_VMEM_LIMIT_CAP,
                         max(16 * 1024 * 1024, 2 * block_bytes + (2 << 20)))

        kernel = functools.partial(
            _hinge_loss_kernel,
            tiles_total=tiles_total,
            rows_in_last_tile=rows_in_last_tile,
        )

        partials = pl.pallas_call(
            kernel,
            out_shape=jax.ShapeDtypeStruct((num_splits, 1, 128), jnp.float32),
            grid=(num_splits, tiles_per_split),
            in_specs=[
                pl.BlockSpec(
                    (tile_rows, 128),
                    # Clamp overflow steps (uneven tile split) onto the last
                    # real block; those steps are skipped inside the kernel.
                    lambda c, i: (
                        jnp.minimum(c * tiles_per_split + i, last_real), 0),
                )
            ],
            out_specs=pl.BlockSpec((1, 1, 128), lambda c, i: (c, 0, 0)),
            compiler_params=pltpu.CompilerParams(
                # TODO(synk): if a v7x profile shows only one TensorCore busy,
                # switch the leading axis to pltpu.CORE_PARALLEL.
                dimension_semantics=("parallel", "arbitrary"),
                vmem_limit_bytes=vmem_limit,
            ),
            cost_estimate=pl.CostEstimate(
                flops=4 * rows_full * 128,
                transcendentals=0,
                bytes_accessed=rows_full * 128 * itemsize + num_splits * 128 * 4,
            ),
        )(x)

        # Odd lanes never mix with even lanes under the axis-0 reduction, so
        # parity selection happens once here, on the tiny partial result.
        total = total + jnp.sum(partials[..., 0::2])

    if rem > 0:
        # <64 leftover pairs: cheaper in plain JAX than padding the stream
        # (jnp.pad would force an extra full HBM read+write pass).
        tail = flat[rows_full * 128:].reshape(-1, 2).astype(jnp.float32)
        total = total + jnp.sum(jnp.maximum(1.0 - (tail[:, 0] - tail[:, 1]), 0.0))

    return total / n


if __name__ == "__main__":
    key = jax.random.PRNGKey(0)
    k_scores, k_labels = jax.random.split(key)

    # Small but non-trivial: 200 pairs -> 3 full 128-lane rows go through the
    # Pallas kernel, plus an 8-pair plain-JAX remainder path.
    batch = 200
    scores = jax.random.normal(k_scores, (batch, 2), dtype=jnp.float32)
    labels = jax.random.bernoulli(k_labels, 0.5, (batch,)).astype(jnp.float32)

    loss = hinge_loss(scores, labels)
    loss = jax.block_until_ready(loss)

    # pure-JAX reference check
    ref = jnp.mean(jnp.maximum(1.0 - (scores[:, 0] - scores[:, 1]), 0.0))
    assert jnp.allclose(loss, ref, atol=1e-5, rtol=1e-5), (loss, ref)

    print("KERNEL_OK")
</pallas_src>

<mosaic_0001>
module attributes {stable_mosaic.version = 11 : i64} {
  func.func @_hinge_loss_kernel(%arg0: i32, %arg1: i32, %arg2: memref<3x128xf32, #tpu.memory_space<vmem>>, %arg3: memref<1x1x128xf32, #tpu.memory_space<vmem>>) attributes {dimension_semantics = [#tpu.dimension_semantics<parallel>, #tpu.dimension_semantics<arbitrary>], iteration_bounds = array<i64: 1, 1>, scalar_prefetch = 0 : i64, scratch_operands = 0 : i64, tpu.core_type = #tpu.core_type<tc>, window_params = [{transform_indices = @transform_0, window_bounds = array<i64: 3, 128>}, {transform_indices = @transform_1, window_bounds = array<i64: 1, 1, 128>}]} {
    %c1_i32 = arith.constant 1 : i32
    %0 = arith.muli %arg0, %c1_i32 : i32
    %1 = arith.addi %0, %arg1 : i32
    %c0_i32 = arith.constant 0 : i32
    %2 = arith.cmpi eq, %arg1, %c0_i32 : i32
    %3 = arith.extui %2 : i1 to i32
    %c0_i32_0 = arith.constant 0 : i32
    %4 = arith.cmpi ne, %3, %c0_i32_0 : i32
    scf.if %4 {
      %cst = arith.constant 0.000000e+00 : f32
      %8 = vector.broadcast %cst : f32 to vector<1x1x128xf32>
      %c0 = arith.constant 0 : index
      %c0_3 = arith.constant 0 : index
      %c0_4 = arith.constant 0 : index
      %9 = vector.load %arg3[%c0, %c0_3, %c0_4] : memref<1x1x128xf32, #tpu.memory_space<vmem>>, vector<1x1x128xf32>
      tpu.vector_store %arg3[%c0, %c0_3, %c0_4], %8 {strides = array<i32>} : memref<1x1x128xf32, #tpu.memory_space<vmem>>, vector<1x1x128xf32>,
    } else {
    }
    %c0_i32_1 = arith.constant 0 : i32
    %5 = arith.cmpi sle, %1, %c0_i32_1 : i32
    %6 = arith.extui %5 : i1 to i32
    %c0_i32_2 = arith.constant 0 : i32
    %7 = arith.cmpi ne, %6, %c0_i32_2 : i32
    scf.if %7 {
      %c0 = arith.constant 0 : index
      %c0_3 = arith.constant 0 : index
      %c0_4 = arith.constant 0 : index
      %8 = vector.load %arg3[%c0, %c0_3, %c0_4] : memref<1x1x128xf32, #tpu.memory_space<vmem>>, vector<1x1x128xf32>
      %c0_5 = arith.constant 0 : index
      %c0_6 = arith.constant 0 : index
      %9 = vector.load %arg2[%c0_5, %c0_6] : memref<3x128xf32, #tpu.memory_space<vmem>>, vector<3x128xf32>
      %c127_i32 = arith.constant 127 : i32
      %10 = tpu.dynamic_rotate %9 by %c127_i32 dim 1 : vector<3x128xf32>, i32 -> vector<3x128xf32>
      %11 = arith.subf %9, %10 : vector<3x128xf32>
      %cst = arith.constant 1.000000e+00 : f32
      %12 = vector.broadcast %cst : f32 to vector<3x128xf32>
      %13 = arith.subf %12, %11 : vector<3x128xf32>
      %cst_7 = arith.constant 0.000000e+00 : f32
      %14 = vector.broadcast %cst_7 : f32 to vector<3x128xf32>
      %15 = arith.maximumf %13, %14 : vector<3x128xf32>
      %cst_8 = arith.constant dense<0.000000e+00> : vector<128xf32>
      %16 = vector.multi_reduction <add>, %15, %cst_8 [0] : vector<3x128xf32> to vector<128xf32>
      %17 = vector.shape_cast %16 : vector<128xf32> to vector<1x128xf32>
      %18 = vector.shape_cast %17 : vector<1x128xf32> to vector<1x1x128xf32>
      %19 = arith.addf %8, %18 : vector<1x1x128xf32>
      %c0_9 = arith.constant 0 : index
      %c0_10 = arith.constant 0 : index
      %c0_11 = arith.constant 0 : index
      %20 = vector.load %arg3[%c0_9, %c0_10, %c0_11] : memref<1x1x128xf32, #tpu.memory_space<vmem>>, vector<1x1x128xf32>
      tpu.vector_store %arg3[%c0_9, %c0_10, %c0_11], %19 {strides = array<i32>} : memref<1x1x128xf32, #tpu.memory_space<vmem>>, vector<1x1x128xf32>,
    } else {
    }
    return
  }
  func.func @transform_0(%arg0: i32, %arg1: i32) -> (i32, i32) {
    %c1_i32 = arith.constant 1 : i32
    %0 = arith.muli %arg0, %c1_i32 : i32
    %1 = arith.addi %0, %arg1 : i32
    %c0_i32 = arith.constant 0 : i32
    %2 = arith.minsi %1, %c0_i32 : i32
    %c0_i32_0 = arith.constant 0 : i32
    %c0_i32_1 = arith.constant 0 : i32
    return %2, %c0_i32_0 : i32, i32
  }
  func.func @transform_1(%arg0: i32, %arg1: i32) -> (i32, i32, i32) {
    %c0_i32 = arith.constant 0 : i32
    %c0_i32_0 = arith.constant 0 : i32
    %c0_i32_1 = arith.constant 0 : i32
    return %arg0, %c0_i32, %c0_i32_0 : i32, i32, i32
  }
}

</mosaic_0001>

<llo_original>
// kernel: tpu_custom_call.1
$region0: #{tpu_custom_call.1}
  #allocation0 [shape = 'u32[]', space=smem, size = 0x4, offset = 0x4, fixed_abs, tag = 'smem constant byte address 0x4 - core index']
  #allocation1 [shape = 'u32[72,128]{1,0:T(1,128)}', space=vmem, size = 0x9000, scoped, tag = 'internal scratch']
  %s0 = inlined_call_operand.hbm [shape: f32[3,128], index: 0, kind: input, shape index: {}]
  %s1 = inlined_call_operand.hbm [shape: f32[1,1,128], index: 1, kind: output, shape index: {}]
  %s2 = sld [smem:[#allocation0]]
  $region26: #{tpu_custom_call.1} parent=0
    _
  %s4 = ssub.s32 1, %s2
  %s5 = scalar_select 0, %s4, %s2
  $region1: #{tpu_custom_call.1} parent=0
    #allocation2 [shape = 'u8[2048]{0}', space=vmem, size = 0x800, scoped, tag = 'input window, operand 0, single buffered']
    #allocation3 [shape = 's32[1]{0}', space=sflag, size = 0x4, scoped, tag = 'scoped memory for tpu_custom_call.1']
    #allocation4 [shape = 's32[1]{0}', space=sflag, size = 0x4, scoped, tag = 'scoped memory for tpu_custom_call.1']
    #allocation5 [shape = 'u8[512]{0}', space=vmem, size = 0x400, scoped, tag = 'output window, operand 0, single buffered']
    %6 = vsyncpa [#allocation3], 0
    %7 = vsyncpa [#allocation4], 0
    // Predicated region
    $region2: #{tpu_custom_call.1} parent=1 // pred_check
      _
    $region3: #{tpu_custom_call.1} parent=1 // pred_check_branch
      %9 = sbr.rel (0) target = $region5
    $region4: #{tpu_custom_call.1} parent=1 // pred_region
      %s10 = sadd.s32 0, 0
      %p11 = scmp.lt.s32.totalorder %s10, 0
      %s12 = scalar_select %p11, %s10, 0
      %14 = vsyncadd [#allocation3], 0
      %s15 = smul.addr %s12, 4
      %s16 = scalar_lea.hbm %s0, %s15
      %s18 = sshll.u32 %s16, 4
      %s19 = int_to_ptr.hbm [resolvable:$true] %s18
      %s20 = sshll.u32 [#allocation2], 4
      %s21 = int_to_ptr.vmem [resolvable:$true] %s20
      %23 = dma.hbm_to_vmem [thread:$0]  %s19, 64, %s21, [#allocation3]
    $region5: #{tpu_custom_call.1} parent=1 // pred_fallthru
      _
    // Predicated region
    $region6: #{tpu_custom_call.1} parent=1 // pred_check
      _
    $region7: #{tpu_custom_call.1} parent=1 // pred_check_branch
      %25 = sbr.rel (0) target = $region9
    $region8: #{tpu_custom_call.1} parent=1 // pred_region
      %27 = dma.done [#allocation3], 64
    $region9: #{tpu_custom_call.1} parent=1 // pred_fallthru
      _
    %s28 = sadd.s32 0, 0
    %p29 = scmp.lt.s32.totalorder %s28, 0
    %s30 = scalar_select %p29, %s28, 0
    %s31 = sadd.s32 0, 0
    %p32 = scmp.eq.s32.totalorder 0, 0
    // Predicated region
    $region10: #{tpu_custom_call.1} parent=1 // pred_check
      %p33 = pneg %p32
    $region11: #{tpu_custom_call.1} parent=1 // pred_check_branch
      %35 = sbr.rel (%p33) target = $region13
    $region12: #{tpu_custom_call.1} parent=1 // pred_region
      %36 = vst [vmem:[#allocation5] sm:$0x1] 0.0
    $region13: #{tpu_custom_call.1} parent=1 // pred_fallthru
      _
    %p37 = scmp.le.s32.totalorder %s31, 0
    // Predicated region
    $region14: #{tpu_custom_call.1} parent=1 // pred_check
      %p38 = pneg %p37
    $region15: #{tpu_custom_call.1} parent=1 // pred_check_branch
      %40 = sbr.rel (%p38) target = $region17
    $region16: #{tpu_custom_call.1} parent=1 // pred_region
      %v41 = vld [vmem:[#allocation5] sm:$0x1]
      %v42 = vld [vmem:[#allocation2] sm:$0x7]
      %43 = vrot.lane.b32.xlu0 %v42, 127
      %v44 = vpop.permute.xlu0 %43
      %v45 = vsub.f32 %v42, %v44
      %v46 = vsub.f32 1.0, %v45
      %v47 = vmax.f32 %v46, 0.0
      %vm48 = vcmask 1042432
      %v49 = vsel %vm48, %v47, 0.0
      %v50 = vrot.slane %v49, 4
      %v51 = vadd.f32 %v49, %v50
      %v52 = vrot.slane %v51, 2
      %v53 = vadd.f32 %v51, %v52
      %v54 = vrot.slane %v53, 1
      %v55 = vadd.f32 %v53, %v54
      %v56 = vadd.f32 %v41, %v55
      %57 = vst [vmem:[#allocation5] sm:$0x1] %v56
    $region17: #{tpu_custom_call.1} parent=1 // pred_fallthru
      _
    // Predicated region
    $region18: #{tpu_custom_call.1} parent=1 // pred_check
      _
    $region19: #{tpu_custom_call.1} parent=1 // pred_check_branch
      %59 = sbr.rel (0) target = $region21
    $region20: #{tpu_custom_call.1} parent=1 // pred_region
      %61 = vsyncadd [#allocation4], 0
      %s63 = sshll.u32 [#allocation5], 4
      %s64 = int_to_ptr.vmem [resolvable:$true] %s63
      %s65 = sshll.u32 %s1, 4
      %s66 = int_to_ptr.hbm [resolvable:$true] %s65
      %68 = dma.vmem_to_hbm [thread:$0]  %s64, 16, %s66, [#allocation4]
    $region21: #{tpu_custom_call.1} parent=1 // pred_fallthru
      _
    // Predicated region
    $region22: #{tpu_custom_call.1} parent=1 // pred_check
      _
    $region23: #{tpu_custom_call.1} parent=1 // pred_check_branch
      %70 = sbr.rel (0) target = $region25
    $region24: #{tpu_custom_call.1} parent=1 // pred_region
      %72 = dma.done [#allocation4], 16
    $region25: #{tpu_custom_call.1} parent=1 // pred_fallthru
      _
    %73 = vsyncpa [#allocation3], 1
    %74 = vsyncpa [#allocation4], 1

</llo_original>
